<compile_context>
chip_gen: v7x
topology: tpu7x:2x2x1
jax: 0.10.0
libtpu: 0.0.40
codegen_flags: <defaults>
</compile_context>

<pallas_src>
import jax
import jax.numpy as jnp
from jax.experimental import pallas as pl
from jax.experimental.pallas import tpu as pltpu

_LANES = 128
_SUBLANES = 8


def _cdiv(a: int, b: int) -> int:
    return (a + b - 1) // b


def _glm_kernel(b_ref, x_ref, o_ref):
    # b_ref: (n_pred,)               f32 beta scalars, resident in SMEM
    # x_ref: (n_pred, tile_rows, 128) lane-dense transposed design-matrix tile
    # o_ref: (tile_rows, 128)         lane-dense output tile
    n_pred = x_ref.shape[0]
    # VPU scalar-broadcast MAC; unrolled over the (small, static) predictor axis.
    acc = b_ref[0] * x_ref[0]
    for k in range(1, n_pred):
        acc = acc + b_ref[k] * x_ref[k]
    o_ref[...] = acc.astype(o_ref.dtype)


def bold_glm_forward(
    X: jax.Array,
    betas: jax.Array,
    *,
    tile_rows: int | None = None,
    vmem_limit_bytes: int | None = None,
) -> jax.Array:
    """Compute X @ betas with a Pallas TPU kernel.

    X:     [n_samples, n_predictors] float32
    betas: [n_predictors, 1]         float32
    returns [n_samples, 1]           float32
    """
    n_samples, n_pred = X.shape
    assert betas.shape == (n_pred, 1)
    dtype = X.dtype

    # Each output "row" of the dense slab covers 128 samples (one lane group).
    n_rows = _cdiv(n_samples, _LANES)

    if tile_rows is None:
        # ~2 MiB of X per tile: large enough to amortize per-step overhead,
        # small enough (double-buffered) for every TPU generation's VMEM.
        target = (2 * 1024 * 1024) // (n_pred * _LANES * 4)
        tile_rows = max(_SUBLANES, (target // _SUBLANES) * _SUBLANES)

    if tile_rows >= n_rows:
        tile_rows = n_rows                      # single full-extent block
        n_rows_pad = n_rows
    else:
        tile_rows = max(_SUBLANES, (tile_rows // _SUBLANES) * _SUBLANES)
        n_rows_pad = _cdiv(n_rows, tile_rows) * tile_rows

    n_pad = n_rows_pad * _LANES

    # One-time lane-dense layout plumbing:
    #   X [n_samples, n_pred] -> X_T [n_pred, n_pad] -> [n_pred, n_rows_pad, 128]
    x_t = X.T
    if n_pad != n_samples:
        x_t = jnp.pad(x_t, ((0, 0), (0, n_pad - n_samples)))
    x_t3 = x_t.reshape(n_pred, n_rows_pad, _LANES)

    betas_flat = betas.reshape(n_pred)          # -> SMEM scalar table

    grid = (n_rows_pad // tile_rows,)

    if vmem_limit_bytes is None:
        # 2x (double-buffer) * (X tile + out tile), with generous headroom.
        per_step = 4 * tile_rows * _LANES * (n_pred + 1)
        vmem_limit_bytes = min(128 * 1024 * 1024,
                               max(4 * 1024 * 1024, 4 * per_step))

    cost = pl.CostEstimate(
        flops=2 * n_samples * n_pred,
        transcendentals=0,
        bytes_accessed=4 * (n_samples * n_pred + n_pred + n_samples),
    )

    out2d = pl.pallas_call(
        _glm_kernel,
        out_shape=jax.ShapeDtypeStruct((n_rows_pad, _LANES), dtype),
        grid_spec=pltpu.PrefetchScalarGridSpec(
            num_scalar_prefetch=0,
            grid=grid,
            in_specs=[
                # betas: tiny, keep resident in SMEM as scalars for the VPU MAC.
                pl.BlockSpec(memory_space=pltpu.MemorySpace.SMEM),
                # X tile: full predictor axis, tile_rows x 128 samples per step.
                pl.BlockSpec((n_pred, tile_rows, _LANES), lambda i: (0, i, 0)),
            ],
            out_specs=pl.BlockSpec((tile_rows, _LANES), lambda i: (i, 0)),
        ),
        compiler_params=pltpu.CompilerParams(
            dimension_semantics=("parallel",),   # shards rows across v7x's 2 TCs
            vmem_limit_bytes=vmem_limit_bytes,
        ),
        cost_estimate=cost,
    )(betas_flat, x_t3)

    # Back to the module's [n_samples, 1] output shape.
    return out2d.reshape(n_pad)[:n_samples].reshape(n_samples, 1)


if __name__ == "__main__":
    key = jax.random.PRNGKey(0)
    k_x, k_b = jax.random.split(key)

    # Small, forward-consistent shapes: 128 "time points" x 8 predictors.
    n_samples, n_predictors = 128, 8

    X = jax.random.normal(k_x, (n_samples, n_predictors), dtype=jnp.float32)
    # Deterministic stand-in for torch.randn(n_predictors, 1) parameter init.
    betas = jax.random.normal(k_b, (n_predictors, 1), dtype=jnp.float32)

    out = bold_glm_forward(X, betas)
    out = jax.block_until_ready(out)

    # Correctness check against plain-JAX reference of X @ betas.
    ref = X @ betas
    assert out.shape == (n_samples, 1)
    assert jnp.allclose(out, ref, atol=1e-5, rtol=1e-5), "mismatch vs reference"

    # Also exercise a ragged, multi-tile case to validate padding + grid path.
    n2 = 1000
    X2 = jax.random.normal(k_x, (n2, n_predictors), dtype=jnp.float32)
    out2 = jax.block_until_ready(bold_glm_forward(X2, betas, tile_rows=8))
    assert out2.shape == (n2, 1)
    assert jnp.allclose(out2, X2 @ betas, atol=1e-5, rtol=1e-5), "ragged mismatch"

    print("KERNEL_OK")
</pallas_src>

<mosaic_0001>
module attributes {stable_mosaic.version = 11 : i64} {
  func.func @_glm_kernel(%arg0: i32, %arg1: memref<8xf32, #tpu.memory_space<smem>>, %arg2: memref<8x1x128xf32, #tpu.memory_space<vmem>>, %arg3: memref<1x128xf32, #tpu.memory_space<vmem>>) attributes {dimension_semantics = [#tpu.dimension_semantics<parallel>], iteration_bounds = array<i64: 1>, scalar_prefetch = 0 : i64, scratch_operands = 0 : i64, tpu.core_type = #tpu.core_type<tc>, window_params = [{transform_indices = @transform_0, window_bounds = array<i64: 8>}, {transform_indices = @transform_1, window_bounds = array<i64: 8, 1, 128>}, {transform_indices = @transform_2, window_bounds = array<i64: 1, 128>}]} {
    %c0 = arith.constant 0 : index
    %0 = memref.load %arg1[%c0] : memref<8xf32, #tpu.memory_space<smem>>
    %c0_0 = arith.constant 0 : index
    %c0_1 = arith.constant 0 : index
    %c0_2 = arith.constant 0 : index
    %1 = vector.load %arg2[%c0_0, %c0_1, %c0_2] : memref<8x1x128xf32, #tpu.memory_space<vmem>>, vector<1x1x128xf32>
    %2 = vector.shape_cast %1 : vector<1x1x128xf32> to vector<1x128xf32>
    %3 = vector.broadcast %0 : f32 to vector<1x128xf32>
    %4 = arith.mulf %3, %2 : vector<1x128xf32>
    %c1 = arith.constant 1 : index
    %5 = memref.load %arg1[%c1] : memref<8xf32, #tpu.memory_space<smem>>
    %c1_3 = arith.constant 1 : index
    %c0_4 = arith.constant 0 : index
    %c0_5 = arith.constant 0 : index
    %6 = vector.load %arg2[%c1_3, %c0_4, %c0_5] : memref<8x1x128xf32, #tpu.memory_space<vmem>>, vector<1x1x128xf32>
    %7 = vector.shape_cast %6 : vector<1x1x128xf32> to vector<1x128xf32>
    %8 = vector.broadcast %5 : f32 to vector<1x128xf32>
    %9 = arith.mulf %8, %7 : vector<1x128xf32>
    %10 = arith.addf %4, %9 : vector<1x128xf32>
    %c2 = arith.constant 2 : index
    %11 = memref.load %arg1[%c2] : memref<8xf32, #tpu.memory_space<smem>>
    %c2_6 = arith.constant 2 : index
    %c0_7 = arith.constant 0 : index
    %c0_8 = arith.constant 0 : index
    %12 = vector.load %arg2[%c2_6, %c0_7, %c0_8] : memref<8x1x128xf32, #tpu.memory_space<vmem>>, vector<1x1x128xf32>
    %13 = vector.shape_cast %12 : vector<1x1x128xf32> to vector<1x128xf32>
    %14 = vector.broadcast %11 : f32 to vector<1x128xf32>
    %15 = arith.mulf %14, %13 : vector<1x128xf32>
    %16 = arith.addf %10, %15 : vector<1x128xf32>
    %c3 = arith.constant 3 : index
    %17 = memref.load %arg1[%c3] : memref<8xf32, #tpu.memory_space<smem>>
    %c3_9 = arith.constant 3 : index
    %c0_10 = arith.constant 0 : index
    %c0_11 = arith.constant 0 : index
    %18 = vector.load %arg2[%c3_9, %c0_10, %c0_11] : memref<8x1x128xf32, #tpu.memory_space<vmem>>, vector<1x1x128xf32>
    %19 = vector.shape_cast %18 : vector<1x1x128xf32> to vector<1x128xf32>
    %20 = vector.broadcast %17 : f32 to vector<1x128xf32>
    %21 = arith.mulf %20, %19 : vector<1x128xf32>
    %22 = arith.addf %16, %21 : vector<1x128xf32>
    %c4 = arith.constant 4 : index
    %23 = memref.load %arg1[%c4] : memref<8xf32, #tpu.memory_space<smem>>
    %c4_12 = arith.constant 4 : index
    %c0_13 = arith.constant 0 : index
    %c0_14 = arith.constant 0 : index
    %24 = vector.load %arg2[%c4_12, %c0_13, %c0_14] : memref<8x1x128xf32, #tpu.memory_space<vmem>>, vector<1x1x128xf32>
    %25 = vector.shape_cast %24 : vector<1x1x128xf32> to vector<1x128xf32>
    %26 = vector.broadcast %23 : f32 to vector<1x128xf32>
    %27 = arith.mulf %26, %25 : vector<1x128xf32>
    %28 = arith.addf %22, %27 : vector<1x128xf32>
    %c5 = arith.constant 5 : index
    %29 = memref.load %arg1[%c5] : memref<8xf32, #tpu.memory_space<smem>>
    %c5_15 = arith.constant 5 : index
    %c0_16 = arith.constant 0 : index
    %c0_17 = arith.constant 0 : index
    %30 = vector.load %arg2[%c5_15, %c0_16, %c0_17] : memref<8x1x128xf32, #tpu.memory_space<vmem>>, vector<1x1x128xf32>
    %31 = vector.shape_cast %30 : vector<1x1x128xf32> to vector<1x128xf32>
    %32 = vector.broadcast %29 : f32 to vector<1x128xf32>
    %33 = arith.mulf %32, %31 : vector<1x128xf32>
    %34 = arith.addf %28, %33 : vector<1x128xf32>
    %c6 = arith.constant 6 : index
    %35 = memref.load %arg1[%c6] : memref<8xf32, #tpu.memory_space<smem>>
    %c6_18 = arith.constant 6 : index
    %c0_19 = arith.constant 0 : index
    %c0_20 = arith.constant 0 : index
    %36 = vector.load %arg2[%c6_18, %c0_19, %c0_20] : memref<8x1x128xf32, #tpu.memory_space<vmem>>, vector<1x1x128xf32>
    %37 = vector.shape_cast %36 : vector<1x1x128xf32> to vector<1x128xf32>
    %38 = vector.broadcast %35 : f32 to vector<1x128xf32>
    %39 = arith.mulf %38, %37 : vector<1x128xf32>
    %40 = arith.addf %34, %39 : vector<1x128xf32>
    %c7 = arith.constant 7 : index
    %41 = memref.load %arg1[%c7] : memref<8xf32, #tpu.memory_space<smem>>
    %c7_21 = arith.constant 7 : index
    %c0_22 = arith.constant 0 : index
    %c0_23 = arith.constant 0 : index
    %42 = vector.load %arg2[%c7_21, %c0_22, %c0_23] : memref<8x1x128xf32, #tpu.memory_space<vmem>>, vector<1x1x128xf32>
    %43 = vector.shape_cast %42 : vector<1x1x128xf32> to vector<1x128xf32>
    %44 = vector.broadcast %41 : f32 to vector<1x128xf32>
    %45 = arith.mulf %44, %43 : vector<1x128xf32>
    %46 = arith.addf %40, %45 : vector<1x128xf32>
    %c0_24 = arith.constant 0 : index
    %c0_25 = arith.constant 0 : index
    %47 = vector.load %arg3[%c0_24, %c0_25] : memref<1x128xf32, #tpu.memory_space<vmem>>, vector<1x128xf32>
    tpu.vector_store %arg3[%c0_24, %c0_25], %46 {strides = array<i32>} : memref<1x128xf32, #tpu.memory_space<vmem>>, vector<1x128xf32>,
    return
  }
  func.func @transform_0(%arg0: i32) -> i32 {
    %c0_i32 = arith.constant 0 : i32
    %c0_i32_0 = arith.constant 0 : i32
    return %c0_i32 : i32
  }
  func.func @transform_1(%arg0: i32) -> (i32, i32, i32) {
    %c0_i32 = arith.constant 0 : i32
    %c0_i32_0 = arith.constant 0 : i32
    %c0_i32_1 = arith.constant 0 : i32
    return %c0_i32, %arg0, %c0_i32_0 : i32, i32, i32
  }
  func.func @transform_2(%arg0: i32) -> (i32, i32) {
    %c0_i32 = arith.constant 0 : i32
    %c0_i32_0 = arith.constant 0 : i32
    return %arg0, %c0_i32 : i32, i32
  }
}

</mosaic_0001>

<llo_original>
// kernel: tpu_custom_call.1
$region0: #{tpu_custom_call.1}
  #allocation0 [shape = 'u32[]', space=smem, size = 0x4, offset = 0x4, fixed_abs, tag = 'smem constant byte address 0x4 - core index']
  #allocation1 [shape = 'u32[144,128]{1,0:T(1,128)}', space=vmem, size = 0x12000, scoped, tag = 'internal scratch']
  %s0 = inlined_call_operand.hbm [shape: f32[8], index: 0, kind: input, shape index: {}]
  %s1 = inlined_call_operand.hbm [shape: f32[8,1,128], index: 1, kind: input, shape index: {}]
  %s2 = inlined_call_operand.hbm [shape: f32[1,128], index: 2, kind: output, shape index: {}]
  %s3 = sld [smem:[#allocation0]]
  $region26: #{tpu_custom_call.1} parent=0
    _
  %s5 = ssub.s32 1, %s3
  %s6 = scalar_select 0, %s5, %s3
  $region1: #{tpu_custom_call.1} parent=0
    #allocation2 [shape = 'u8[512]{0}', space=smem, size = 0x200, scoped, tag = 'input window, operand 0, single buffered']
    #allocation3 [shape = 's32[1]{0}', space=sflag, size = 0x4, scoped, tag = 'scoped memory for tpu_custom_call.1']
    #allocation4 [shape = 's32[1]{0}', space=sflag, size = 0x4, scoped, tag = 'scoped memory for tpu_custom_call.1']
    #allocation5 [shape = 's32[1]{0}', space=sflag, size = 0x4, scoped, tag = 'scoped memory for tpu_custom_call.1']
    #allocation6 [shape = 'u8[4096]{0}', space=vmem, size = 0x1000, scoped, tag = 'input window, operand 1, single buffered']
    #allocation7 [shape = 'u8[512]{0}', space=vmem, size = 0x400, scoped, tag = 'output window, operand 0, single buffered']
    %7 = vsyncpa [#allocation5], 0
    %8 = vsyncpa [#allocation3], 0
    %9 = vsyncpa [#allocation4], 0
    // Predicated region
    $region2: #{tpu_custom_call.1} parent=1 // pred_check
      _
    $region3: #{tpu_custom_call.1} parent=1 // pred_check_branch
      %11 = sbr.rel (0) target = $region5
    $region4: #{tpu_custom_call.1} parent=1 // pred_region
      %s13 = ssub.s32 16, 16
      %14 = vsyncadd [#allocation5], %s13
      %17 = dma.hbm_to_smem %s0, 16, [#allocation2], [#allocation5]
    $region5: #{tpu_custom_call.1} parent=1 // pred_fallthru
      _
    // Predicated region
    $region6: #{tpu_custom_call.1} parent=1 // pred_check
      _
    $region7: #{tpu_custom_call.1} parent=1 // pred_check_branch
      %19 = sbr.rel (0) target = $region9
    $region8: #{tpu_custom_call.1} parent=1 // pred_region
      %s21 = ssub.s32 128, 128
      %22 = vsyncadd [#allocation3], %s21
      %s23 = sshll.u32 [#allocation6], 4
      %s24 = int_to_ptr.vmem [resolvable:$true] %s23
      %29 = dma.hbm_to_vmem [thread:$0]  %s1, 128, %s24, [#allocation3], 16, 16, 1
    $region9: #{tpu_custom_call.1} parent=1 // pred_fallthru
      _
    // Predicated region
    $region10: #{tpu_custom_call.1} parent=1 // pred_check
      _
    $region11: #{tpu_custom_call.1} parent=1 // pred_check_branch
      %31 = sbr.rel (0) target = $region13
    $region12: #{tpu_custom_call.1} parent=1 // pred_region
      %32 = dma.done [#allocation5], 16
    $region13: #{tpu_custom_call.1} parent=1 // pred_fallthru
      _
    // Predicated region
    $region14: #{tpu_custom_call.1} parent=1 // pred_check
      _
    $region15: #{tpu_custom_call.1} parent=1 // pred_check_branch
      %34 = sbr.rel (0) target = $region17
    $region16: #{tpu_custom_call.1} parent=1 // pred_region
      %35 = dma.done [#allocation3], 128
    $region17: #{tpu_custom_call.1} parent=1 // pred_fallthru
      _
    %36 = sfence
    %s37 = sld [smem:[#allocation2]]
    %v38 = vld [vmem:[#allocation6] sm:$0x1]
    %v39 = vstv %s37
    %v40 = vmul.f32 %v39, %v38
    %s41 = sld [smem:[#allocation2 + $0x1]]
    %s42 = scalar_lea.vmem [#allocation6], 1
    %v43 = vld [vmem:[%s42] sm:$0x1]
    %v44 = vstv %s41
    %v45 = vmul.f32 %v44, %v43
    %v46 = vadd.f32 %v40, %v45
    %s47 = sld [smem:[#allocation2 + $0x2]]
    %s48 = scalar_lea.vmem [#allocation6], 2
    %v49 = vld [vmem:[%s48] sm:$0x1]
    %v50 = vstv %s47
    %v51 = vmul.f32 %v50, %v49
    %v52 = vadd.f32 %v46, %v51
    %s53 = sld [smem:[#allocation2 + $0x3]]
    %s54 = scalar_lea.vmem [#allocation6], 3
    %v55 = vld [vmem:[%s54] sm:$0x1]
    %v56 = vstv %s53
    %v57 = vmul.f32 %v56, %v55
    %v58 = vadd.f32 %v52, %v57
    %s59 = sld [smem:[#allocation2 + $0x4]]
    %s60 = scalar_lea.vmem [#allocation6], 4
    %v61 = vld [vmem:[%s60] sm:$0x1]
    %v62 = vstv %s59
    %v63 = vmul.f32 %v62, %v61
    %v64 = vadd.f32 %v58, %v63
    %s65 = sld [smem:[#allocation2 + $0x5]]
    %s66 = scalar_lea.vmem [#allocation6], 5
    %v67 = vld [vmem:[%s66] sm:$0x1]
    %v68 = vstv %s65
    %v69 = vmul.f32 %v68, %v67
    %v70 = vadd.f32 %v64, %v69
    %s71 = sld [smem:[#allocation2 + $0x6]]
    %s72 = scalar_lea.vmem [#allocation6], 6
    %v73 = vld [vmem:[%s72] sm:$0x1]
    %v74 = vstv %s71
    %v75 = vmul.f32 %v74, %v73
    %v76 = vadd.f32 %v70, %v75
    %s77 = sld [smem:[#allocation2 + $0x7]]
    %s78 = scalar_lea.vmem [#allocation6], 7
    %v79 = vld [vmem:[%s78] sm:$0x1]
    %v80 = vstv %s77
    %v81 = vmul.f32 %v80, %v79
    %v82 = vadd.f32 %v76, %v81
    %83 = vst [vmem:[#allocation7] sm:$0x1] %v82
    // Predicated region
    $region18: #{tpu_custom_call.1} parent=1 // pred_check
      _
    $region19: #{tpu_custom_call.1} parent=1 // pred_check_branch
      %85 = sbr.rel (0) target = $region21
    $region20: #{tpu_custom_call.1} parent=1 // pred_region
      %s87 = ssub.s32 16, 16
      %88 = vsyncadd [#allocation4], %s87
      %s90 = sshll.u32 [#allocation7], 4
      %s91 = int_to_ptr.vmem [resolvable:$true] %s90
      %93 = dma.vmem_to_hbm [thread:$0]  %s91, 16, %s2, [#allocation4]
    $region21: #{tpu_custom_call.1} parent=1 // pred_fallthru
      _
    // Predicated region
    $region22: #{tpu_custom_call.1} parent=1 // pred_check
      _
    $region23: #{tpu_custom_call.1} parent=1 // pred_check_branch
      %95 = sbr.rel (0) target = $region25
    $region24: #{tpu_custom_call.1} parent=1 // pred_region
      %96 = dma.done [#allocation4], 16
    $region25: #{tpu_custom_call.1} parent=1 // pred_fallthru
      _
    %97 = vsyncpa [#allocation3], 1
    %98 = vsyncpa [#allocation4], 1
    %99 = vsyncpa [#allocation5], 1

</llo_original>
